<compile_context>
chip_gen: v7x
topology: tpu7x:2x2x1
jax: 0.10.0
libtpu: 0.0.40
codegen_flags: <defaults>
</compile_context>

<pallas_src>
import functools
import math

import jax
import jax.numpy as jnp
from jax.experimental import pallas as pl
from jax.experimental.pallas import tpu as pltpu

_NUM_SUMS = 7            # L_A, L_B, N_A, N_B, F_A, F_B, count(weights < 0)
_LOG_LO = math.log(1e-4)
_LOG_HI = math.log(1.0 - 1e-4)


def _cdiv(a, b):
    return -(-a // b)


def _rup(a, b):
    return _cdiv(a, b) * b


def _pose_loss_kernel(yhat_ref, y_ref, out_ref, acc_ref, *,
                      height, tile_h, tiles_per_split, thresh,
                      use_l1, nonlinear_flow, flow_c, needs_mask):
    s = pl.program_id(0)
    i = pl.program_id(1)

    @pl.when(i == 0)
    def _init():
        acc_ref[...] = jnp.zeros_like(acc_ref)

    num_ch = yhat_ref.shape[1]

    x = yhat_ref[:, 0].astype(jnp.float32)   # prob logits, (B, tile_h, W)
    w = y_ref[:, 0].astype(jnp.float32)      # weights,     (B, tile_h, W)

    pos = w > thresh
    neg_a = w < 0.0            # variant A: weights < 0
    neg_b = w == 0.0           # variant B: weights == 0

    if needs_mask:
        row = jax.lax.broadcasted_iota(jnp.int32, x.shape, 1)
        start = (s * tiles_per_split + i) * tile_h
        valid = (start + row) < height
        # Padded rows must never count as pos/neg (safe for any thresh) and
        # must not inject NaN/Inf through the log / flow terms.
        pos = jnp.logical_and(pos, valid)
        neg_a = jnp.logical_and(neg_a, valid)
        neg_b = jnp.logical_and(neg_b, valid)
        x = jnp.where(valid, x, 0.0)

    pos = pos.astype(jnp.float32)
    neg_a = neg_a.astype(jnp.float32)
    neg_b = neg_b.astype(jnp.float32)

    # log(clamp(sigmoid(x))) / log(clamp(1 - sigmoid(x))) via one stable
    # softplus; clipping in log space is exactly the prob clamp.
    sp = jnp.log(1.0 + jnp.exp(-jnp.abs(x)))
    log_p = jnp.clip(jnp.minimum(x, 0.0) - sp, _LOG_LO, _LOG_HI)
    log_1p = jnp.clip(-jnp.maximum(x, 0.0) - sp, _LOG_LO, _LOG_HI)

    # Flow error summed over flow channels; channel slices are major-dim views.
    ferr = jnp.zeros_like(x)
    for ch in range(1, num_ch):
        f = yhat_ref[:, ch].astype(jnp.float32)
        g = y_ref[:, ch].astype(jnp.float32)
        if nonlinear_flow:
            f = jnp.tanh(flow_c * f)
        d = f - g
        ferr = ferr + (jnp.abs(d) if use_l1 else d * d)
    if needs_mask:
        ferr = jnp.where(valid, ferr, 0.0)

    pos_lp = pos * log_p
    sel_a = pos + neg_a        # disjoint masks (thresh=0.5) -> logical OR
    sel_b = pos + neg_b

    def bsum(q):               # reduce over batch: leading dim -> cheap adds
        return jnp.sum(q, axis=0)

    acc_ref[0] += bsum(pos_lp + neg_a * log_1p)   # L_A
    acc_ref[1] += bsum(pos_lp + neg_b * log_1p)   # L_B
    acc_ref[2] += bsum(sel_a)                     # N_A
    acc_ref[3] += bsum(sel_b)                     # N_B
    acc_ref[4] += bsum(sel_a * ferr)              # F_A
    acc_ref[5] += bsum(sel_b * ferr)              # F_B
    acc_ref[6] += bsum(neg_a)                     # count of negative weights

    @pl.when(i == tiles_per_split - 1)
    def _flush():
        # One cross-row reduce per split; output is a tiny (_NUM_SUMS, W) slab.
        for k in range(_NUM_SUMS):
            out_ref[k:k + 1, :] = jnp.sum(acc_ref[k], axis=0, keepdims=True)


def pose_loss(y_hat, y, *, alpha=1.0, beta=1.0, pose_loss_type="l2",
              nonlinear_flow=False, flow_c=1.0, thresh=0.5,
              max_block_bytes=2 << 20):
    """Pallas implementation of PoseLoss.forward (defaults). Returns scalar f32."""
    assert y_hat.shape == y.shape and y_hat.ndim == 4
    B, C, H, W = y_hat.shape
    assert C >= 2, "need 1 prob channel + >=1 flow channel"

    itemsize = max(y_hat.dtype.itemsize, y.dtype.itemsize)
    in_itemsize = y_hat.dtype.itemsize + y.dtype.itemsize
    sub = {4: 8, 2: 16, 1: 32}.get(itemsize, 8)   # sublane packing of tile_h

    # --- row-tile selection; budget uses sublane/lane-PADDED sizes -----------
    w_pad = _rup(W, 128)
    bytes_per_row = itemsize * B * C * w_pad
    tile_budget = max(sub, (max_block_bytes // bytes_per_row) // sub * sub)

    n_tiles = _cdiv(H, tile_budget)
    if H > sub:
        n_tiles = max(n_tiles, 2)      # always feed the 2nd TensorCore (v7x)
        if n_tiles % 2:
            n_tiles += 1               # even tile count so the 2-way split holds
    if n_tiles == 1:
        tile_h = H                     # single full-height block (any H is legal)
    else:
        tile_h = min(_rup(_cdiv(H, n_tiles), sub), tile_budget)

    splits = 2 if n_tiles >= 2 else 1
    tiles_per_split = n_tiles // splits
    n_real = _cdiv(H, tile_h)          # row-blocks that overlap real data
    needs_mask = (n_tiles * tile_h != H)

    if n_tiles > n_real:               # padding tiles exist -> clamp their DMA
        last = n_real - 1
        in_map = lambda s, i: (0, 0, jnp.minimum(s * tiles_per_split + i, last), 0)
    else:
        in_map = lambda s, i: (0, 0, s * tiles_per_split + i, 0)

    # --- explicit VMEM limit from padded footprints ---------------------------
    tile_h_in_pad = _rup(tile_h, sub)
    tile_h_f32_pad = _rup(tile_h, 8)
    in_block = in_itemsize * B * C * tile_h_in_pad * w_pad      # both inputs
    acc_bytes = 4 * _NUM_SUMS * tile_h_f32_pad * w_pad
    out_bytes = 4 * 8 * w_pad
    vmem_need = 2 * in_block + acc_bytes + 2 * out_bytes
    vmem_limit = int(min(max(2 * vmem_need, 16 << 20), 64 << 20))

    kernel = functools.partial(
        _pose_loss_kernel,
        height=H, tile_h=tile_h, tiles_per_split=tiles_per_split,
        thresh=float(thresh), use_l1=(pose_loss_type == "l1"),
        nonlinear_flow=bool(nonlinear_flow), flow_c=float(flow_c),
        needs_mask=needs_mask)

    partials = pl.pallas_call(
        kernel,
        out_shape=jax.ShapeDtypeStruct((splits, _NUM_SUMS, W), jnp.float32),
        grid_spec=pltpu.PrefetchScalarGridSpec(
            num_scalar_prefetch=0,
            grid=(splits, tiles_per_split),
            in_specs=[
                pl.BlockSpec((B, C, tile_h, W), in_map),
                pl.BlockSpec((B, C, tile_h, W), in_map),
            ],
            out_specs=pl.BlockSpec((None, _NUM_SUMS, W), lambda s, i: (s, 0, 0)),
            scratch_shapes=[pltpu.VMEM((_NUM_SUMS, tile_h, W), jnp.float32)],
        ),
        compiler_params=pltpu.CompilerParams(
            dimension_semantics=("parallel", "arbitrary"),
            vmem_limit_bytes=vmem_limit),
    )(y_hat, y)

    sums = jnp.sum(partials, axis=(0, 2))               # (7,)
    any_neg = sums[6] > 0.0
    log_sum = jnp.where(any_neg, sums[0], sums[1])
    n_sel = jnp.where(any_neg, sums[2], sums[3])
    flow_sum = jnp.where(any_neg, sums[4], sums[5])
    prob_loss = -log_sum / n_sel
    flow_loss = flow_sum / n_sel
    return beta * flow_loss + alpha * prob_loss


def pose_loss_ref(y_hat, y, *, alpha=1.0, beta=1.0, pose_loss_type="l2",
                  nonlinear_flow=False, flow_c=1.0, thresh=0.5):
    """Pure-JAX reference mirroring the PyTorch forward."""
    prob = jnp.clip(jax.nn.sigmoid(y_hat[:, 0:1]), 1e-4, 1.0 - 1e-4)
    flow = y_hat[:, 1:]
    weights = y[:, 0:1]
    gt_flow = y[:, 1:]
    pos_mask = weights > thresh
    any_neg = jnp.any(weights < 0)
    neg_mask = jnp.where(any_neg, weights < 0, weights == 0)
    select_mask = jnp.logical_or(pos_mask, neg_mask)
    n_sel = jnp.sum(select_mask)
    prob_loss = -jnp.sum(jnp.log(prob) * pos_mask
                         + jnp.log(1.0 - prob) * neg_mask) / n_sel
    f = jnp.tanh(flow_c * flow) if nonlinear_flow else flow
    err = jnp.abs(f - gt_flow) if pose_loss_type == "l1" else (f - gt_flow) ** 2
    flow_loss = jnp.sum(err * select_mask) / n_sel
    return beta * flow_loss + alpha * prob_loss


if __name__ == "__main__":
    key = jax.random.PRNGKey(0)
    k_w, k_w2, k_flow, k_hat = jax.random.split(key, 4)

    B, C, H, W = 2, 3, 16, 16
    alpha, beta = 2.0, 0.5

    # weights channel: mix of cell(1), low-conf(0.2/0.7), unlabeled(0), bg(<0)
    levels = jnp.array([-0.8, -0.3, 0.0, 0.2, 0.7, 1.0], dtype=jnp.float32)
    widx = jax.random.randint(k_w, (B, 1, H, W), 0, levels.shape[0])
    weights = levels[widx]
    gt_flow = jax.random.normal(k_flow, (B, C - 1, H, W), dtype=jnp.float32)
    y = jnp.concatenate([weights, gt_flow], axis=1)
    y_hat = jax.random.normal(k_hat, (B, C, H, W), dtype=jnp.float32) * 2.0

    # 1) default path (negative weights present -> neg_mask = weights < 0)
    out = jax.block_until_ready(pose_loss(y_hat, y, alpha=alpha, beta=beta))
    ref = pose_loss_ref(y_hat, y, alpha=alpha, beta=beta)
    assert jnp.allclose(out, ref, rtol=1e-4, atol=1e-4), ("case1", out, ref)

    # 2) no negative weights -> neg_mask = (weights == 0) branch
    levels_nn = jnp.array([0.0, 0.0, 0.2, 0.7, 1.0], dtype=jnp.float32)
    widx2 = jax.random.randint(k_w2, (B, 1, H, W), 0, levels_nn.shape[0])
    y_nn = jnp.concatenate([levels_nn[widx2], gt_flow], axis=1)
    out2 = jax.block_until_ready(pose_loss(y_hat, y_nn, alpha=alpha, beta=beta))
    ref2 = pose_loss_ref(y_hat, y_nn, alpha=alpha, beta=beta)
    assert jnp.allclose(out2, ref2, rtol=1e-4, atol=1e-4), ("case2", out2, ref2)

    # 3) L1 + nonlinear flow variant
    out3 = jax.block_until_ready(pose_loss(
        y_hat, y, alpha=alpha, beta=beta, pose_loss_type="l1",
        nonlinear_flow=True, flow_c=3.0))
    ref3 = pose_loss_ref(y_hat, y, alpha=alpha, beta=beta, pose_loss_type="l1",
                         nonlinear_flow=True, flow_c=3.0)
    assert jnp.allclose(out3, ref3, rtol=1e-4, atol=1e-4), ("case3", out3, ref3)

    # 4) ragged H + tiny block budget -> odd tile count padded to even, fully
    #    out-of-range padding tile (clamped DMA), and row-mask path.
    H4, W4 = 20, 24
    widx4 = jax.random.randint(k_w, (B, 1, H4, W4), 0, levels.shape[0])
    y4 = jnp.concatenate(
        [levels[widx4],
         jax.random.normal(k_flow, (B, C - 1, H4, W4), dtype=jnp.float32)],
        axis=1)
    y_hat4 = jax.random.normal(k_hat, (B, C, H4, W4), dtype=jnp.float32) * 2.0
    out4 = jax.block_until_ready(pose_loss(y_hat4, y4, alpha=alpha, beta=beta,
                                           max_block_bytes=4096))
    ref4 = pose_loss_ref(y_hat4, y4, alpha=alpha, beta=beta)
    assert jnp.allclose(out4, ref4, rtol=1e-4, atol=1e-4), ("case4", out4, ref4)

    # 5) low threshold on the ragged input -> padded rows must not leak into
    #    the pos mask (exercises the mask-AND correctness fix).
    out5 = jax.block_until_ready(pose_loss(y_hat4, y4, alpha=alpha, beta=beta,
                                           thresh=0.1, max_block_bytes=4096))
    ref5 = pose_loss_ref(y_hat4, y4, alpha=alpha, beta=beta, thresh=0.1)
    assert jnp.allclose(out5, ref5, rtol=1e-4, atol=1e-4), ("case5", out5, ref5)

    print("KERNEL_OK")
</pallas_src>

<mosaic_0001>
module attributes {stable_mosaic.version = 11 : i64} {
  func.func @_pose_loss_kernel(%arg0: i32, %arg1: i32, %arg2: memref<2x3x8x16xf32, #tpu.memory_space<vmem>>, %arg3: memref<2x3x8x16xf32, #tpu.memory_space<vmem>>, %arg4: memref<1x7x16xf32, #tpu.memory_space<vmem>>, %arg5: memref<7x8x16xf32, #tpu.memory_space<vmem>>) attributes {dimension_semantics = [#tpu.dimension_semantics<parallel>, #tpu.dimension_semantics<arbitrary>], iteration_bounds = array<i64: 2, 1>, scalar_prefetch = 0 : i64, scratch_operands = 1 : i64, tpu.core_type = #tpu.core_type<tc>, window_params = [{transform_indices = @transform_0, window_bounds = array<i64: 2, 3, 8, 16>}, {transform_indices = @transform_1, window_bounds = array<i64: 2, 3, 8, 16>}, {transform_indices = @transform_2, window_bounds = array<i64: 1, 7, 16>}]} {
    %c0_i32 = arith.constant 0 : i32
    %0 = arith.cmpi eq, %arg1, %c0_i32 : i32
    %1 = arith.extui %0 : i1 to i32
    %c0_i32_0 = arith.constant 0 : i32
    %2 = arith.cmpi ne, %1, %c0_i32_0 : i32
    scf.if %2 {
      %cst_81 = arith.constant 0.000000e+00 : f32
      %118 = vector.broadcast %cst_81 : f32 to vector<7x8x16xf32>
      %c0_82 = arith.constant 0 : index
      %c0_83 = arith.constant 0 : index
      %c0_84 = arith.constant 0 : index
      %119 = vector.load %arg5[%c0_82, %c0_83, %c0_84] : memref<7x8x16xf32, #tpu.memory_space<vmem>>, vector<7x8x16xf32>
      tpu.vector_store %arg5[%c0_82, %c0_83, %c0_84], %118 {strides = array<i32>} : memref<7x8x16xf32, #tpu.memory_space<vmem>>, vector<7x8x16xf32>,
    } else {
    }
    %c0 = arith.constant 0 : index
    %c0_1 = arith.constant 0 : index
    %c0_2 = arith.constant 0 : index
    %c0_3 = arith.constant 0 : index
    %3 = vector.load %arg2[%c0, %c0_1, %c0_2, %c0_3] : memref<2x3x8x16xf32, #tpu.memory_space<vmem>>, vector<2x1x8x16xf32>
    %4 = vector.shape_cast %3 : vector<2x1x8x16xf32> to vector<2x8x16xf32>
    %c0_4 = arith.constant 0 : index
    %c0_5 = arith.constant 0 : index
    %c0_6 = arith.constant 0 : index
    %c0_7 = arith.constant 0 : index
    %5 = vector.load %arg3[%c0_4, %c0_5, %c0_6, %c0_7] : memref<2x3x8x16xf32, #tpu.memory_space<vmem>>, vector<2x1x8x16xf32>
    %6 = vector.shape_cast %5 : vector<2x1x8x16xf32> to vector<2x8x16xf32>
    %cst = arith.constant 5.000000e-01 : f32
    %7 = vector.broadcast %cst : f32 to vector<2x8x16xf32>
    %8 = arith.cmpf ogt, %6, %7 : vector<2x8x16xf32>
    %cst_8 = arith.constant 0.000000e+00 : f32
    %9 = vector.broadcast %cst_8 : f32 to vector<2x8x16xf32>
    %10 = arith.cmpf olt, %6, %9 : vector<2x8x16xf32>
    %cst_9 = arith.constant 0.000000e+00 : f32
    %11 = vector.broadcast %cst_9 : f32 to vector<2x8x16xf32>
    %12 = arith.cmpf oeq, %6, %11 : vector<2x8x16xf32>
    %13 = arith.extui %8 : vector<2x8x16xi1> to vector<2x8x16xi32>
    %14 = arith.sitofp %13 : vector<2x8x16xi32> to vector<2x8x16xf32>
    %15 = arith.extui %10 : vector<2x8x16xi1> to vector<2x8x16xi32>
    %16 = arith.sitofp %15 : vector<2x8x16xi32> to vector<2x8x16xf32>
    %17 = arith.extui %12 : vector<2x8x16xi1> to vector<2x8x16xi32>
    %18 = arith.sitofp %17 : vector<2x8x16xi32> to vector<2x8x16xf32>
    %19 = math.absf %4 : vector<2x8x16xf32>
    %cst_10 = arith.constant 0.000000e+00 : f32
    %20 = vector.broadcast %cst_10 : f32 to vector<2x8x16xf32>
    %21 = arith.subf %20, %19 : vector<2x8x16xf32>
    %22 = math.exp %21 : vector<2x8x16xf32>
    %cst_11 = arith.constant 1.000000e+00 : f32
    %23 = vector.broadcast %cst_11 : f32 to vector<2x8x16xf32>
    %24 = arith.addf %23, %22 : vector<2x8x16xf32>
    %25 = math.log %24 : vector<2x8x16xf32>
    %cst_12 = arith.constant 0.000000e+00 : f32
    %26 = vector.broadcast %cst_12 : f32 to vector<2x8x16xf32>
    %27 = arith.minimumf %4, %26 : vector<2x8x16xf32>
    %28 = arith.subf %27, %25 : vector<2x8x16xf32>
    %cst_13 = arith.constant -9.21034049 : f32
    %cst_14 = arith.constant -1.000050e-04 : f32
    %29 = vector.broadcast %cst_13 : f32 to vector<2x8x16xf32>
    %30 = arith.maximumf %29, %28 : vector<2x8x16xf32>
    %31 = vector.broadcast %cst_14 : f32 to vector<2x8x16xf32>
    %32 = arith.minimumf %31, %30 : vector<2x8x16xf32>
    %cst_15 = arith.constant 0.000000e+00 : f32
    %33 = vector.broadcast %cst_15 : f32 to vector<2x8x16xf32>
    %34 = arith.maximumf %4, %33 : vector<2x8x16xf32>
    %cst_16 = arith.constant 0.000000e+00 : f32
    %35 = vector.broadcast %cst_16 : f32 to vector<2x8x16xf32>
    %36 = arith.subf %35, %34 : vector<2x8x16xf32>
    %37 = arith.subf %36, %25 : vector<2x8x16xf32>
    %cst_17 = arith.constant -9.21034049 : f32
    %cst_18 = arith.constant -1.000050e-04 : f32
    %38 = vector.broadcast %cst_17 : f32 to vector<2x8x16xf32>
    %39 = arith.maximumf %38, %37 : vector<2x8x16xf32>
    %40 = vector.broadcast %cst_18 : f32 to vector<2x8x16xf32>
    %41 = arith.minimumf %40, %39 : vector<2x8x16xf32>
    %cst_19 = arith.constant 0.000000e+00 : f32
    %42 = vector.broadcast %cst_19 : f32 to vector<2x8x16xf32>
    %c0_20 = arith.constant 0 : index
    %c1 = arith.constant 1 : index
    %c0_21 = arith.constant 0 : index
    %c0_22 = arith.constant 0 : index
    %43 = vector.load %arg2[%c0_20, %c1, %c0_21, %c0_22] : memref<2x3x8x16xf32, #tpu.memory_space<vmem>>, vector<2x1x8x16xf32>
    %44 = vector.shape_cast %43 : vector<2x1x8x16xf32> to vector<2x8x16xf32>
    %c0_23 = arith.constant 0 : index
    %c1_24 = arith.constant 1 : index
    %c0_25 = arith.constant 0 : index
    %c0_26 = arith.constant 0 : index
    %45 = vector.load %arg3[%c0_23, %c1_24, %c0_25, %c0_26] : memref<2x3x8x16xf32, #tpu.memory_space<vmem>>, vector<2x1x8x16xf32>
    %46 = vector.shape_cast %45 : vector<2x1x8x16xf32> to vector<2x8x16xf32>
    %47 = arith.subf %44, %46 : vector<2x8x16xf32>
    %48 = arith.mulf %47, %47 : vector<2x8x16xf32>
    %49 = arith.addf %42, %48 : vector<2x8x16xf32>
    %c0_27 = arith.constant 0 : index
    %c2 = arith.constant 2 : index
    %c0_28 = arith.constant 0 : index
    %c0_29 = arith.constant 0 : index
    %50 = vector.load %arg2[%c0_27, %c2, %c0_28, %c0_29] : memref<2x3x8x16xf32, #tpu.memory_space<vmem>>, vector<2x1x8x16xf32>
    %51 = vector.shape_cast %50 : vector<2x1x8x16xf32> to vector<2x8x16xf32>
    %c0_30 = arith.constant 0 : index
    %c2_31 = arith.constant 2 : index
    %c0_32 = arith.constant 0 : index
    %c0_33 = arith.constant 0 : index
    %52 = vector.load %arg3[%c0_30, %c2_31, %c0_32, %c0_33] : memref<2x3x8x16xf32, #tpu.memory_space<vmem>>, vector<2x1x8x16xf32>
    %53 = vector.shape_cast %52 : vector<2x1x8x16xf32> to vector<2x8x16xf32>
    %54 = arith.subf %51, %53 : vector<2x8x16xf32>
    %55 = arith.mulf %54, %54 : vector<2x8x16xf32>
    %56 = arith.addf %49, %55 : vector<2x8x16xf32>
    %57 = arith.mulf %14, %32 : vector<2x8x16xf32>
    %58 = arith.addf %14, %16 : vector<2x8x16xf32>
    %59 = arith.addf %14, %18 : vector<2x8x16xf32>
    %c0_34 = arith.constant 0 : index
    %c0_35 = arith.constant 0 : index
    %c0_36 = arith.constant 0 : index
    %60 = vector.load %arg5[%c0_34, %c0_35, %c0_36] : memref<7x8x16xf32, #tpu.memory_space<vmem>>, vector<1x8x16xf32>
    %61 = vector.shape_cast %60 : vector<1x8x16xf32> to vector<8x16xf32>
    %62 = arith.mulf %16, %41 : vector<2x8x16xf32>
    %63 = arith.addf %57, %62 : vector<2x8x16xf32>
    %cst_37 = arith.constant dense<0.000000e+00> : vector<8x16xf32>
    %64 = vector.multi_reduction <add>, %63, %cst_37 [0] : vector<2x8x16xf32> to vector<8x16xf32>
    %65 = arith.addf %61, %64 : vector<8x16xf32>
    %c0_38 = arith.constant 0 : index
    %c0_39 = arith.constant 0 : index
    %c0_40 = arith.constant 0 : index
    %66 = vector.load %arg5[%c0_38, %c0_39, %c0_40] : memref<7x8x16xf32, #tpu.memory_space<vmem>>, vector<1x8x16xf32>
    %67 = vector.shape_cast %66 : vector<1x8x16xf32> to vector<8x16xf32>
    %68 = vector.shape_cast %65 : vector<8x16xf32> to vector<1x8x16xf32>
    tpu.vector_store %arg5[%c0_38, %c0_39, %c0_40], %68 {strides = array<i32>} : memref<7x8x16xf32, #tpu.memory_space<vmem>>, vector<1x8x16xf32>,
    %c1_41 = arith.constant 1 : index
    %c0_42 = arith.constant 0 : index
    %c0_43 = arith.constant 0 : index
    %69 = vector.load %arg5[%c1_41, %c0_42, %c0_43] : memref<7x8x16xf32, #tpu.memory_space<vmem>>, vector<1x8x16xf32>
    %70 = vector.shape_cast %69 : vector<1x8x16xf32> to vector<8x16xf32>
    %71 = arith.mulf %18, %41 : vector<2x8x16xf32>
    %72 = arith.addf %57, %71 : vector<2x8x16xf32>
    %cst_44 = arith.constant dense<0.000000e+00> : vector<8x16xf32>
    %73 = vector.multi_reduction <add>, %72, %cst_44 [0] : vector<2x8x16xf32> to vector<8x16xf32>
    %74 = arith.addf %70, %73 : vector<8x16xf32>
    %c1_45 = arith.constant 1 : index
    %c0_46 = arith.constant 0 : index
    %c0_47 = arith.constant 0 : index
    %75 = vector.load %arg5[%c1_45, %c0_46, %c0_47] : memref<7x8x16xf32, #tpu.memory_space<vmem>>, vector<1x8x16xf32>
    %76 = vector.shape_cast %75 : vector<1x8x16xf32> to vector<8x16xf32>
    %77 = vector.shape_cast %74 : vector<8x16xf32> to vector<1x8x16xf32>
    tpu.vector_store %arg5[%c1_45, %c0_46, %c0_47], %77 {strides = array<i32>} : memref<7x8x16xf32, #tpu.memory_space<vmem>>, vector<1x8x16xf32>,
    %c2_48 = arith.constant 2 : index
    %c0_49 = arith.constant 0 : index
    %c0_50 = arith.constant 0 : index
    %78 = vector.load %arg5[%c2_48, %c0_49, %c0_50] : memref<7x8x16xf32, #tpu.memory_space<vmem>>, vector<1x8x16xf32>
    %79 = vector.shape_cast %78 : vector<1x8x16xf32> to vector<8x16xf32>
    %cst_51 = arith.constant dense<0.000000e+00> : vector<8x16xf32>
    %80 = vector.multi_reduction <add>, %58, %cst_51 [0] : vector<2x8x16xf32> to vector<8x16xf32>
    %81 = arith.addf %79, %80 : vector<8x16xf32>
    %c2_52 = arith.constant 2 : index
    %c0_53 = arith.constant 0 : index
    %c0_54 = arith.constant 0 : index
    %82 = vector.load %arg5[%c2_52, %c0_53, %c0_54] : memref<7x8x16xf32, #tpu.memory_space<vmem>>, vector<1x8x16xf32>
    %83 = vector.shape_cast %82 : vector<1x8x16xf32> to vector<8x16xf32>
    %84 = vector.shape_cast %81 : vector<8x16xf32> to vector<1x8x16xf32>
    tpu.vector_store %arg5[%c2_52, %c0_53, %c0_54], %84 {strides = array<i32>} : memref<7x8x16xf32, #tpu.memory_space<vmem>>, vector<1x8x16xf32>,
    %c3 = arith.constant 3 : index
    %c0_55 = arith.constant 0 : index
    %c0_56 = arith.constant 0 : index
    %85 = vector.load %arg5[%c3, %c0_55, %c0_56] : memref<7x8x16xf32, #tpu.memory_space<vmem>>, vector<1x8x16xf32>
    %86 = vector.shape_cast %85 : vector<1x8x16xf32> to vector<8x16xf32>
    %cst_57 = arith.constant dense<0.000000e+00> : vector<8x16xf32>
    %87 = vector.multi_reduction <add>, %59, %cst_57 [0] : vector<2x8x16xf32> to vector<8x16xf32>
    %88 = arith.addf %86, %87 : vector<8x16xf32>
    %c3_58 = arith.constant 3 : index
    %c0_59 = arith.constant 0 : index
    %c0_60 = arith.constant 0 : index
    %89 = vector.load %arg5[%c3_58, %c0_59, %c0_60] : memref<7x8x16xf32, #tpu.memory_space<vmem>>, vector<1x8x16xf32>
    %90 = vector.shape_cast %89 : vector<1x8x16xf32> to vector<8x16xf32>
    %91 = vector.shape_cast %88 : vector<8x16xf32> to vector<1x8x16xf32>
    tpu.vector_store %arg5[%c3_58, %c0_59, %c0_60], %91 {strides = array<i32>} : memref<7x8x16xf32, #tpu.memory_space<vmem>>, vector<1x8x16xf32>,
    %c4 = arith.constant 4 : index
    %c0_61 = arith.constant 0 : index
    %c0_62 = arith.constant 0 : index
    %92 = vector.load %arg5[%c4, %c0_61, %c0_62] : memref<7x8x16xf32, #tpu.memory_space<vmem>>, vector<1x8x16xf32>
    %93 = vector.shape_cast %92 : vector<1x8x16xf32> to vector<8x16xf32>
    %94 = arith.mulf %58, %56 : vector<2x8x16xf32>
    %cst_63 = arith.constant dense<0.000000e+00> : vector<8x16xf32>
    %95 = vector.multi_reduction <add>, %94, %cst_63 [0] : vector<2x8x16xf32> to vector<8x16xf32>
    %96 = arith.addf %93, %95 : vector<8x16xf32>
    %c4_64 = arith.constant 4 : index
    %c0_65 = arith.constant 0 : index
    %c0_66 = arith.constant 0 : index
    %97 = vector.load %arg5[%c4_64, %c0_65, %c0_66] : memref<7x8x16xf32, #tpu.memory_space<vmem>>, vector<1x8x16xf32>
    %98 = vector.shape_cast %97 : vector<1x8x16xf32> to vector<8x16xf32>
    %99 = vector.shape_cast %96 : vector<8x16xf32> to vector<1x8x16xf32>
    tpu.vector_store %arg5[%c4_64, %c0_65, %c0_66], %99 {strides = array<i32>} : memref<7x8x16xf32, #tpu.memory_space<vmem>>, vector<1x8x16xf32>,
    %c5 = arith.constant 5 : index
    %c0_67 = arith.constant 0 : index
    %c0_68 = arith.constant 0 : index
    %100 = vector.load %arg5[%c5, %c0_67, %c0_68] : memref<7x8x16xf32, #tpu.memory_space<vmem>>, vector<1x8x16xf32>
    %101 = vector.shape_cast %100 : vector<1x8x16xf32> to vector<8x16xf32>
    %102 = arith.mulf %59, %56 : vector<2x8x16xf32>
    %cst_69 = arith.constant dense<0.000000e+00> : vector<8x16xf32>
    %103 = vector.multi_reduction <add>, %102, %cst_69 [0] : vector<2x8x16xf32> to vector<8x16xf32>
    %104 = arith.addf %101, %103 : vector<8x16xf32>
    %c5_70 = arith.constant 5 : index
    %c0_71 = arith.constant 0 : index
    %c0_72 = arith.constant 0 : index
    %105 = vector.load %arg5[%c5_70, %c0_71, %c0_72] : memref<7x8x16xf32, #tpu.memory_space<vmem>>, vector<1x8x16xf32>
    %106 = vector.shape_cast %105 : vector<1x8x16xf32> to vector<8x16xf32>
    %107 = vector.shape_cast %104 : vector<8x16xf32> to vector<1x8x16xf32>
    tpu.vector_store %arg5[%c5_70, %c0_71, %c0_72], %107 {strides = array<i32>} : memref<7x8x16xf32, #tpu.memory_space<vmem>>, vector<1x8x16xf32>,
    %c6 = arith.constant 6 : index
    %c0_73 = arith.constant 0 : index
    %c0_74 = arith.constant 0 : index
    %108 = vector.load %arg5[%c6, %c0_73, %c0_74] : memref<7x8x16xf32, #tpu.memory_space<vmem>>, vector<1x8x16xf32>
    %109 = vector.shape_cast %108 : vector<1x8x16xf32> to vector<8x16xf32>
    %cst_75 = arith.constant dense<0.000000e+00> : vector<8x16xf32>
    %110 = vector.multi_reduction <add>, %16, %cst_75 [0] : vector<2x8x16xf32> to vector<8x16xf32>
    %111 = arith.addf %109, %110 : vector<8x16xf32>
    %c6_76 = arith.constant 6 : index
    %c0_77 = arith.constant 0 : index
    %c0_78 = arith.constant 0 : index
    %112 = vector.load %arg5[%c6_76, %c0_77, %c0_78] : memref<7x8x16xf32, #tpu.memory_space<vmem>>, vector<1x8x16xf32>
    %113 = vector.shape_cast %112 : vector<1x8x16xf32> to vector<8x16xf32>
    %114 = vector.shape_cast %111 : vector<8x16xf32> to vector<1x8x16xf32>
    tpu.vector_store %arg5[%c6_76, %c0_77, %c0_78], %114 {strides = array<i32>} : memref<7x8x16xf32, #tpu.memory_space<vmem>>, vector<1x8x16xf32>,
    %c0_i32_79 = arith.constant 0 : i32
    %115 = arith.cmpi eq, %arg1, %c0_i32_79 : i32
    %116 = arith.extui %115 : i1 to i32
    %c0_i32_80 = arith.constant 0 : i32
    %117 = arith.cmpi ne, %116, %c0_i32_80 : i32
    scf.if %117 {
      %c0_81 = arith.constant 0 : index
      %c0_82 = arith.constant 0 : index
      %c0_83 = arith.constant 0 : index
      %118 = vector.load %arg5[%c0_81, %c0_82, %c0_83] : memref<7x8x16xf32, #tpu.memory_space<vmem>>, vector<1x8x16xf32>
      %119 = vector.shape_cast %118 : vector<1x8x16xf32> to vector<8x16xf32>
      %cst_84 = arith.constant dense<0.000000e+00> : vector<16xf32>
      %120 = vector.multi_reduction <add>, %119, %cst_84 [0] : vector<8x16xf32> to vector<16xf32>
      %121 = vector.shape_cast %120 : vector<16xf32> to vector<1x16xf32>
      %c0_85 = arith.constant 0 : index
      %c0_86 = arith.constant 0 : index
      %c0_87 = arith.constant 0 : index
      %122 = vector.load %arg4[%c0_85, %c0_86, %c0_87] : memref<1x7x16xf32, #tpu.memory_space<vmem>>, vector<1x1x16xf32>
      %123 = vector.shape_cast %122 : vector<1x1x16xf32> to vector<1x16xf32>
      %124 = vector.shape_cast %121 : vector<1x16xf32> to vector<1x1x16xf32>
      tpu.vector_store %arg4[%c0_85, %c0_86, %c0_87], %124 {strides = array<i32>} : memref<1x7x16xf32, #tpu.memory_space<vmem>>, vector<1x1x16xf32>,
      %c1_88 = arith.constant 1 : index
      %c0_89 = arith.constant 0 : index
      %c0_90 = arith.constant 0 : index
      %125 = vector.load %arg5[%c1_88, %c0_89, %c0_90] : memref<7x8x16xf32, #tpu.memory_space<vmem>>, vector<1x8x16xf32>
      %126 = vector.shape_cast %125 : vector<1x8x16xf32> to vector<8x16xf32>
      %cst_91 = arith.constant dense<0.000000e+00> : vector<16xf32>
      %127 = vector.multi_reduction <add>, %126, %cst_91 [0] : vector<8x16xf32> to vector<16xf32>
      %128 = vector.shape_cast %127 : vector<16xf32> to vector<1x16xf32>
      %c0_92 = arith.constant 0 : index
      %c1_93 = arith.constant 1 : index
      %c0_94 = arith.constant 0 : index
      %129 = vector.load %arg4[%c0_92, %c1_93, %c0_94] : memref<1x7x16xf32, #tpu.memory_space<vmem>>, vector<1x1x16xf32>
      %130 = vector.shape_cast %129 : vector<1x1x16xf32> to vector<1x16xf32>
      %131 = vector.shape_cast %128 : vector<1x16xf32> to vector<1x1x16xf32>
      tpu.vector_store %arg4[%c0_92, %c1_93, %c0_94], %131 {strides = array<i32>} : memref<1x7x16xf32, #tpu.memory_space<vmem>>, vector<1x1x16xf32>,
      %c2_95 = arith.constant 2 : index
      %c0_96 = arith.constant 0 : index
      %c0_97 = arith.constant 0 : index
      %132 = vector.load %arg5[%c2_95, %c0_96, %c0_97] : memref<7x8x16xf32, #tpu.memory_space<vmem>>, vector<1x8x16xf32>
      %133 = vector.shape_cast %132 : vector<1x8x16xf32> to vector<8x16xf32>
      %cst_98 = arith.constant dense<0.000000e+00> : vector<16xf32>
      %134 = vector.multi_reduction <add>, %133, %cst_98 [0] : vector<8x16xf32> to vector<16xf32>
      %135 = vector.shape_cast %134 : vector<16xf32> to vector<1x16xf32>
      %c0_99 = arith.constant 0 : index
      %c2_100 = arith.constant 2 : index
      %c0_101 = arith.constant 0 : index
      %136 = vector.load %arg4[%c0_99, %c2_100, %c0_101] : memref<1x7x16xf32, #tpu.memory_space<vmem>>, vector<1x1x16xf32>
      %137 = vector.shape_cast %136 : vector<1x1x16xf32> to vector<1x16xf32>
      %138 = vector.shape_cast %135 : vector<1x16xf32> to vector<1x1x16xf32>
      tpu.vector_store %arg4[%c0_99, %c2_100, %c0_101], %138 {strides = array<i32>} : memref<1x7x16xf32, #tpu.memory_space<vmem>>, vector<1x1x16xf32>,
      %c3_102 = arith.constant 3 : index
      %c0_103 = arith.constant 0 : index
      %c0_104 = arith.constant 0 : index
      %139 = vector.load %arg5[%c3_102, %c0_103, %c0_104] : memref<7x8x16xf32, #tpu.memory_space<vmem>>, vector<1x8x16xf32>
      %140 = vector.shape_cast %139 : vector<1x8x16xf32> to vector<8x16xf32>
      %cst_105 = arith.constant dense<0.000000e+00> : vector<16xf32>
      %141 = vector.multi_reduction <add>, %140, %cst_105 [0] : vector<8x16xf32> to vector<16xf32>
      %142 = vector.shape_cast %141 : vector<16xf32> to vector<1x16xf32>
      %c0_106 = arith.constant 0 : index
      %c3_107 = arith.constant 3 : index
      %c0_108 = arith.constant 0 : index
      %143 = vector.load %arg4[%c0_106, %c3_107, %c0_108] : memref<1x7x16xf32, #tpu.memory_space<vmem>>, vector<1x1x16xf32>
      %144 = vector.shape_cast %143 : vector<1x1x16xf32> to vector<1x16xf32>
      %145 = vector.shape_cast %142 : vector<1x16xf32> to vector<1x1x16xf32>
      tpu.vector_store %arg4[%c0_106, %c3_107, %c0_108], %145 {strides = array<i32>} : memref<1x7x16xf32, #tpu.memory_space<vmem>>, vector<1x1x16xf32>,
      %c4_109 = arith.constant 4 : index
      %c0_110 = arith.constant 0 : index
      %c0_111 = arith.constant 0 : index
      %146 = vector.load %arg5[%c4_109, %c0_110, %c0_111] : memref<7x8x16xf32, #tpu.memory_space<vmem>>, vector<1x8x16xf32>
      %147 = vector.shape_cast %146 : vector<1x8x16xf32> to vector<8x16xf32>
      %cst_112 = arith.constant dense<0.000000e+00> : vector<16xf32>
      %148 = vector.multi_reduction <add>, %147, %cst_112 [0] : vector<8x16xf32> to vector<16xf32>
      %149 = vector.shape_cast %148 : vector<16xf32> to vector<1x16xf32>
      %c0_113 = arith.constant 0 : index
      %c4_114 = arith.constant 4 : index
      %c0_115 = arith.constant 0 : index
      %150 = vector.load %arg4[%c0_113, %c4_114, %c0_115] : memref<1x7x16xf32, #tpu.memory_space<vmem>>, vector<1x1x16xf32>
      %151 = vector.shape_cast %150 : vector<1x1x16xf32> to vector<1x16xf32>
      %152 = vector.shape_cast %149 : vector<1x16xf32> to vector<1x1x16xf32>
      tpu.vector_store %arg4[%c0_113, %c4_114, %c0_115], %152 {strides = array<i32>} : memref<1x7x16xf32, #tpu.memory_space<vmem>>, vector<1x1x16xf32>,
      %c5_116 = arith.constant 5 : index
      %c0_117 = arith.constant 0 : index
      %c0_118 = arith.constant 0 : index
      %153 = vector.load %arg5[%c5_116, %c0_117, %c0_118] : memref<7x8x16xf32, #tpu.memory_space<vmem>>, vector<1x8x16xf32>
      %154 = vector.shape_cast %153 : vector<1x8x16xf32> to vector<8x16xf32>
      %cst_119 = arith.constant dense<0.000000e+00> : vector<16xf32>
      %155 = vector.multi_reduction <add>, %154, %cst_119 [0] : vector<8x16xf32> to vector<16xf32>
      %156 = vector.shape_cast %155 : vector<16xf32> to vector<1x16xf32>
      %c0_120 = arith.constant 0 : index
      %c5_121 = arith.constant 5 : index
      %c0_122 = arith.constant 0 : index
      %157 = vector.load %arg4[%c0_120, %c5_121, %c0_122] : memref<1x7x16xf32, #tpu.memory_space<vmem>>, vector<1x1x16xf32>
      %158 = vector.shape_cast %157 : vector<1x1x16xf32> to vector<1x16xf32>
      %159 = vector.shape_cast %156 : vector<1x16xf32> to vector<1x1x16xf32>
      tpu.vector_store %arg4[%c0_120, %c5_121, %c0_122], %159 {strides = array<i32>} : memref<1x7x16xf32, #tpu.memory_space<vmem>>, vector<1x1x16xf32>,
      %c6_123 = arith.constant 6 : index
      %c0_124 = arith.constant 0 : index
      %c0_125 = arith.constant 0 : index
      %160 = vector.load %arg5[%c6_123, %c0_124, %c0_125] : memref<7x8x16xf32, #tpu.memory_space<vmem>>, vector<1x8x16xf32>
      %161 = vector.shape_cast %160 : vector<1x8x16xf32> to vector<8x16xf32>
      %cst_126 = arith.constant dense<0.000000e+00> : vector<16xf32>
      %162 = vector.multi_reduction <add>, %161, %cst_126 [0] : vector<8x16xf32> to vector<16xf32>
      %163 = vector.shape_cast %162 : vector<16xf32> to vector<1x16xf32>
      %c0_127 = arith.constant 0 : index
      %c6_128 = arith.constant 6 : index
      %c0_129 = arith.constant 0 : index
      %164 = vector.load %arg4[%c0_127, %c6_128, %c0_129] : memref<1x7x16xf32, #tpu.memory_space<vmem>>, vector<1x1x16xf32>
      %165 = vector.shape_cast %164 : vector<1x1x16xf32> to vector<1x16xf32>
      %166 = vector.shape_cast %163 : vector<1x16xf32> to vector<1x1x16xf32>
      tpu.vector_store %arg4[%c0_127, %c6_128, %c0_129], %166 {strides = array<i32>} : memref<1x7x16xf32, #tpu.memory_space<vmem>>, vector<1x1x16xf32>,
    } else {
    }
    return
  }
  func.func @transform_0(%arg0: i32, %arg1: i32) -> (i32, i32, i32, i32) {
    %c1_i32 = arith.constant 1 : i32
    %0 = arith.muli %arg0, %c1_i32 : i32
    %1 = arith.addi %0, %arg1 : i32
    %c0_i32 = arith.constant 0 : i32
    %c0_i32_0 = arith.constant 0 : i32
    %c0_i32_1 = arith.constant 0 : i32
    %c0_i32_2 = arith.constant 0 : i32
    return %c0_i32, %c0_i32_0, %1, %c0_i32_1 : i32, i32, i32, i32
  }
  func.func @transform_1(%arg0: i32, %arg1: i32) -> (i32, i32, i32, i32) {
    %c1_i32 = arith.constant 1 : i32
    %0 = arith.muli %arg0, %c1_i32 : i32
    %1 = arith.addi %0, %arg1 : i32
    %c0_i32 = arith.constant 0 : i32
    %c0_i32_0 = arith.constant 0 : i32
    %c0_i32_1 = arith.constant 0 : i32
    %c0_i32_2 = arith.constant 0 : i32
    return %c0_i32, %c0_i32_0, %1, %c0_i32_1 : i32, i32, i32, i32
  }
  func.func @transform_2(%arg0: i32, %arg1: i32) -> (i32, i32, i32) {
    %c0_i32 = arith.constant 0 : i32
    %c0_i32_0 = arith.constant 0 : i32
    %c0_i32_1 = arith.constant 0 : i32
    return %arg0, %c0_i32, %c0_i32_0 : i32, i32, i32
  }
}

</mosaic_0001>

<llo_original>
// kernel: tpu_custom_call.1
$region0: #{tpu_custom_call.1}
  #allocation0 [shape = 'u32[]', space=smem, size = 0x4, offset = 0x4, fixed_abs, tag = 'smem constant byte address 0x4 - core index']
  #allocation1 [shape = 'u32[144,128]{1,0:T(1,128)}', space=vmem, size = 0x12000, scoped, tag = 'internal scratch']
  #allocation2 [shape = 'f32[7,8,16]{2,1,0:T(8,128)}', space=vmem, size = 0x7000, scoped, tag = 'scratch operand']
  %s0 = inlined_call_operand.hbm [shape: f32[2,3,16,16], index: 0, kind: input, shape index: {}]
  %s1 = inlined_call_operand.hbm [shape: f32[2,3,16,16], index: 1, kind: input, shape index: {}]
  %s2 = inlined_call_operand.vmem [shape: f32[2,7,16], index: 2, kind: output, shape index: {}]
  %s3 = sld [smem:[#allocation0]]
  $region57: #{tpu_custom_call.1} parent=0
    _
  %s5 = ssub.s32 1, %s3
  %s6 = scalar_select 0, %s5, %s3
  $region1: #{tpu_custom_call.1} parent=0
    #allocation3 [shape = 'u8[49152]{0}', space=vmem, size = 0xc000, scoped, tag = 'input window, operand 0']
    #allocation4 [shape = 's32[2]{0}', space=sflag, size = 0x8, scoped, tag = 'scoped memory for tpu_custom_call.1']
    #allocation5 [shape = 'u8[49152]{0}', space=vmem, size = 0xc000, scoped, tag = 'input window, operand 1']
    #allocation6 [shape = 's32[2]{0}', space=sflag, size = 0x8, scoped, tag = 'scoped memory for tpu_custom_call.1']
    %7 = vsyncpa [#allocation4], 0
    %s8 = scalar_lea.sflag [#allocation4], 1
    %9 = vsyncpa %s8, 0
    %10 = vsyncpa [#allocation6], 0
    %s11 = scalar_lea.sflag [#allocation6], 1
    %12 = vsyncpa %s11, 0
    loop: start=0, step=1, limit=4
    $region2: #{tpu_custom_call.1} parent=1 // loop_pre_header
      _
    $region3: #{tpu_custom_call.1} parent=1 // loop_header
      %s14 = sphi 0, %s18
      %p15 = scmp.ge.s32.totalorder %s14, 4
      %s21 = sphi 0, %s33
      %s22 = sphi 0, %s29
      %s23 = sphi 0, %s21
      %s24 = sphi 0, %s22
      %s25 = sphi 0, %s23
      %s26 = sphi 0, %s24
      %s38 = sphi 0, %s40
      %s41 = sphi 0, %s38
      %s42 = sphi 0, %s41
      %s58 = sphi 0, %s42
      %s66 = sphi 0, %s68
      %s69 = sphi 0, %s66
      %s70 = sphi 0, %s69
      %s86 = sphi 0, %s70
      %s92 = sphi 0, %s94
      %s95 = sphi 0, %s92
      %s96 = sphi 0, %s95
      %s112 = sphi 0, %s96
    $region4: #{tpu_custom_call.1} parent=1 // loop_header_branch
      %17 = sbr.rel (%p15) target = $region8
    $region5: #{tpu_custom_call.1} parent=1 // loop_body
      %s19 = ssub.s32 %s14, 1
      %s20 = ssub.s32 %s14, 2
      %s27 = sadd.s32 1, %s22
      %p28 = scmp.ge.s32.totalorder %s27, 1
      %s29 = scalar_select %p28, 0, %s27
      %s30 = sadd.s32 1, %s21
      %s31 = scalar_select %p28, %s30, %s21
      %p32 = scmp.ge.s32.totalorder %s31, 2
      %s33 = scalar_select %p32, 0, %s31
      %s34 = sadd.s32 %s21, %s22
      %s35 = sadd.s32 %s33, %s29
      %s36 = ssub.s32 %s34, %s35
      %p37 = scmp.eq.s32.totalorder %s36, 0
      %s39 = sadd.s32 %s38, 1
      %s40 = scalar_select %p37, %s38, %s39
      %p43 = pneg %p37
      %p44 = scmp.eq.s32.totalorder %s14, 1
      %p45 = por %p43, %p44
      %p46 = scmp.ne.s32.totalorder %s38, %s41
      %p47 = scmp.eq.s32.totalorder %s14, 0
      %p48 = por %p46, %p47
      %p49 = scmp.ne.s32.totalorder %s38, %s41
      %p50 = scmp.eq.s32.totalorder %s19, 1
      %p51 = por %p49, %p50
      %p52 = scmp.ne.s32.totalorder %s41, %s42
      %p53 = scmp.eq.s32.totalorder %s19, 0
      %p54 = por %p52, %p53
      %p55 = scmp.ne.s32.totalorder %s41, %s42
      %p56 = scmp.eq.s32.totalorder %s20, 1
      %p57 = por %p55, %p56
      %p59 = scmp.ne.s32.totalorder %s42, %s58
      %p60 = scmp.eq.s32.totalorder %s20, 0
      %p61 = por %p59, %p60
      %s62 = sadd.s32 %s21, %s22
      %s63 = sadd.s32 %s33, %s29
      %s64 = ssub.s32 %s62, %s63
      %p65 = scmp.eq.s32.totalorder %s64, 0
      %s67 = sadd.s32 %s66, 1
      %s68 = scalar_select %p65, %s66, %s67
      %p71 = pneg %p65
      %p72 = scmp.eq.s32.totalorder %s14, 1
      %p73 = por %p71, %p72
      %p74 = scmp.ne.s32.totalorder %s66, %s69
      %p75 = scmp.eq.s32.totalorder %s14, 0
      %p76 = por %p74, %p75
      %p77 = scmp.ne.s32.totalorder %s66, %s69
      %p78 = scmp.eq.s32.totalorder %s19, 1
      %p79 = por %p77, %p78
      %p80 = scmp.ne.s32.totalorder %s69, %s70
      %p81 = scmp.eq.s32.totalorder %s19, 0
      %p82 = por %p80, %p81
      %p83 = scmp.ne.s32.totalorder %s69, %s70
      %p84 = scmp.eq.s32.totalorder %s20, 1
      %p85 = por %p83, %p84
      %p87 = scmp.ne.s32.totalorder %s70, %s86
      %p88 = scmp.eq.s32.totalorder %s20, 0
      %p89 = por %p87, %p88
      %s90 = ssub.s32 %s21, %s33
      %p91 = scmp.eq.s32.totalorder %s90, 0
      %s93 = sadd.s32 %s92, 1
      %s94 = scalar_select %p91, %s92, %s93
      %p97 = pneg %p91
      %p98 = scmp.eq.s32.totalorder %s14, 1
      %p99 = por %p97, %p98
      %p100 = scmp.ne.s32.totalorder %s92, %s95
      %p101 = scmp.eq.s32.totalorder %s14, 0
      %p102 = por %p100, %p101
      %p103 = scmp.ne.s32.totalorder %s92, %s95
      %p104 = scmp.eq.s32.totalorder %s19, 1
      %p105 = por %p103, %p104
      %p106 = scmp.ne.s32.totalorder %s95, %s96
      %p107 = scmp.eq.s32.totalorder %s19, 0
      %p108 = por %p106, %p107
      %p109 = scmp.ne.s32.totalorder %s95, %s96
      %p110 = scmp.eq.s32.totalorder %s20, 1
      %p111 = por %p109, %p110
      %p113 = scmp.ne.s32.totalorder %s96, %s112
      %p114 = scmp.eq.s32.totalorder %s20, 0
      %p115 = por %p113, %p114
      %p116 = scmp.le.s32.totalorder 1, %s14
      %p117 = scmp.lt.s32.totalorder %s14, 3
      %p118 = pnand %p116, %p117
      %p119 = pneg %p118
      // Predicated region
      $region9: #{tpu_custom_call.1} parent=5 // pred_check
        _
      $region10: #{tpu_custom_call.1} parent=5 // pred_check_branch
        %121 = sbr.rel (%p118) target = $region12
      $region11: #{tpu_custom_call.1} parent=5 // pred_region
        %s122 = ssub.s32 %s14, 1
      $region12: #{tpu_custom_call.1} parent=5 // pred_fallthru
        _
      %p123 = scmp.lt.s32.totalorder %s14, 2
      // Predicated region
      $region13: #{tpu_custom_call.1} parent=5 // pred_check
        %p124 = pneg %p123
      $region14: #{tpu_custom_call.1} parent=5 // pred_check_branch
        %126 = sbr.rel (%p124) target = $region16
      $region15: #{tpu_custom_call.1} parent=5 // pred_region
        // Predicated region
        $region17: #{tpu_custom_call.1} parent=15 // pred_check
          %p127 = pneg %p48
        $region18: #{tpu_custom_call.1} parent=15 // pred_check_branch
          %129 = sbr.rel (%p127) target = $region20
        $region19: #{tpu_custom_call.1} parent=15 // pred_region
          %s130 = sand.u32 %s38, 1
          %s131 = scalar_lea.sflag [#allocation4], %s130
          %s132 = sand.u32 %s38, 1
          %s133 = smul.addr %s132, 48
          %s134 = scalar_lea.vmem [#allocation3], %s133
          %s135 = sadd.s32 %s21, %s22
          %s137 = ssub.s32 768, 768
          %138 = vsyncadd %s131, %s137
          %s139 = smul.addr %s135, 128
          %s140 = scalar_lea.hbm %s0, %s139
          %s141 = sshll.u32 %s134, 4
          %s142 = int_to_ptr.vmem [resolvable:$true] %s141
          %147 = dma.hbm_to_vmem [thread:$0]  %s140, 768, %s142, %s131, 256, 128, 8
        $region20: #{tpu_custom_call.1} parent=15 // pred_fallthru
          _
        // Predicated region
        $region21: #{tpu_custom_call.1} parent=15 // pred_check
          %p148 = pneg %p76
        $region22: #{tpu_custom_call.1} parent=15 // pred_check_branch
          %150 = sbr.rel (%p148) target = $region24
        $region23: #{tpu_custom_call.1} parent=15 // pred_region
          %s151 = sand.u32 %s66, 1
          %s152 = scalar_lea.sflag [#allocation6], %s151
          %s153 = sand.u32 %s66, 1
          %s154 = smul.addr %s153, 48
          %s155 = scalar_lea.vmem [#allocation5], %s154
          %s156 = sadd.s32 %s21, %s22
          %s158 = ssub.s32 768, 768
          %159 = vsyncadd %s152, %s158
          %s160 = smul.addr %s156, 128
          %s161 = scalar_lea.hbm %s1, %s160
          %s162 = sshll.u32 %s155, 4
          %s163 = int_to_ptr.vmem [resolvable:$true] %s162
          %168 = dma.hbm_to_vmem [thread:$0]  %s161, 768, %s163, %s152, 256, 128, 8
        $region24: #{tpu_custom_call.1} parent=15 // pred_fallthru
          _
      $region16: #{tpu_custom_call.1} parent=5 // pred_fallthru
        _
      %p169 = scmp.le.s32.totalorder 1, %s14
      %p170 = scmp.lt.s32.totalorder %s14, 3
      %p171 = pnand %p169, %p170
      %p172 = pneg %p171
      // Predicated region
      $region25: #{tpu_custom_call.1} parent=5 // pred_check
        _
      $region26: #{tpu_custom_call.1} parent=5 // pred_check_branch
        %174 = sbr.rel (%p171) target = $region28
      $region27: #{tpu_custom_call.1} parent=5 // pred_region
        %s175 = ssub.s32 %s14, 1
        %s176 = sand.u32 %s41, 1
        %s177 = scalar_lea.sflag [#allocation4], %s176
        %s178 = sand.u32 %s41, 1
        %s179 = smul.addr %s178, 48
        %s180 = scalar_lea.vmem [#allocation3], %s179
        // Predicated region
        $region29: #{tpu_custom_call.1} parent=27 // pred_check
          %p181 = pneg %p54
        $region30: #{tpu_custom_call.1} parent=27 // pred_check_branch
          %183 = sbr.rel (%p181) target = $region32
        $region31: #{tpu_custom_call.1} parent=27 // pred_region
          %184 = dma.done %s177, 768
        $region32: #{tpu_custom_call.1} parent=27 // pred_fallthru
          _
        %s185 = sand.u32 %s69, 1
        %s186 = scalar_lea.sflag [#allocation6], %s185
        %s187 = sand.u32 %s69, 1
        %s188 = smul.addr %s187, 48
        %s189 = scalar_lea.vmem [#allocation5], %s188
        // Predicated region
        $region33: #{tpu_custom_call.1} parent=27 // pred_check
          %p190 = pneg %p82
        $region34: #{tpu_custom_call.1} parent=27 // pred_check_branch
          %192 = sbr.rel (%p190) target = $region36
        $region35: #{tpu_custom_call.1} parent=27 // pred_region
          %193 = dma.done %s186, 768
        $region36: #{tpu_custom_call.1} parent=27 // pred_fallthru
          _
        %s194 = sand.u32 %s41, 1
        %s195 = scalar_lea.sflag [#allocation4], %s194
        %s196 = sand.u32 %s41, 1
        %s197 = smul.addr %s196, 48
        %s198 = scalar_lea.vmem [#allocation3], %s197
        %p199 = pneg %p54
        %p200 = pneg %p51
        %s201 = sand.u32 %s69, 1
        %s202 = scalar_lea.sflag [#allocation6], %s201
        %s203 = sand.u32 %s69, 1
        %s204 = smul.addr %s203, 48
        %s205 = scalar_lea.vmem [#allocation5], %s204
        %p206 = pneg %p82
        %p207 = pneg %p79
        %p208 = pneg %p108
        %p209 = pneg %p105
        %p210 = scmp.lt.s32.totalorder %s23, 1
        %s211 = scalar_select %p210, %s23, 1
        %s212 = smul.addr %s211, 8
        %s213 = scalar_lea.vmem %s2, %s212
        %s214 = sadd.s32 %s23, %s24
        %s215 = sadd.s32 %s23, %s24
        %p216 = scmp.lt.s32.totalorder %s23, 1
        %s217 = scalar_select %p216, %s23, 1
        %s218 = smul.addr %s217, 8
        %s219 = scalar_lea.vmem %s2, %s218
        %p220 = scmp.eq.s32.totalorder %s24, 0
        // Predicated region
        $region37: #{tpu_custom_call.1} parent=27 // pred_check
          %p221 = pneg %p220
        $region38: #{tpu_custom_call.1} parent=27 // pred_check_branch
          %223 = sbr.rel (%p221) target = $region40
        $region39: #{tpu_custom_call.1} parent=27 // pred_region
          %vm224 = vcmask 130048
          %225 = vst.msk [vmem:[#allocation2] sm:$0xff] %vm224, 0.0
          %226 = vst.msk [vmem:[#allocation2 + $0x8] sm:$0xff] %vm224, 0.0
          %227 = vst.msk [vmem:[#allocation2 + $0x10] sm:$0xff] %vm224, 0.0
          %228 = vst.msk [vmem:[#allocation2 + $0x18] sm:$0xff] %vm224, 0.0
          %229 = vst.msk [vmem:[#allocation2 + $0x20] sm:$0xff] %vm224, 0.0
          %230 = vst.msk [vmem:[#allocation2 + $0x28] sm:$0xff] %vm224, 0.0
          %231 = vst.msk [vmem:[#allocation2 + $0x30] sm:$0xff] %vm224, 0.0
        $region40: #{tpu_custom_call.1} parent=27 // pred_fallthru
          _
        %v232 = vld [vmem:[%s180] sm:$0xff]
        %v233 = vld [vmem:[%s180 + $0x18] sm:$0xff]
        %v234 = vld [vmem:[%s189] sm:$0xff]
        %v235 = vld [vmem:[%s189 + $0x18] sm:$0xff]
        %vm236 = vcmp.gt.f32.partialorder %v234, 0.5
        %vm237 = vcmp.gt.f32.partialorder %v235, 0.5
        %vm238 = vcmp.lt.f32.partialorder %v234, 0.0
        %vm239 = vcmp.lt.f32.partialorder %v235, 0.0
        %vm240 = vcmp.eq.f32.partialorder %v234, 0.0
        %vm241 = vcmp.eq.f32.partialorder %v235, 0.0
        %v242 = vsel %vm236, 1, 0
        %v243 = vsel %vm237, 1, 0
        %v244 = vcvt.s32.f32 %v242
        %v245 = vcvt.s32.f32 %v243
        %v246 = vsel %vm238, 1, 0
        %v247 = vsel %vm239, 1, 0
        %v248 = vcvt.s32.f32 %v246
        %v249 = vcvt.s32.f32 %v247
        %v250 = vsel %vm240, 1, 0
        %v251 = vsel %vm241, 1, 0
        %v252 = vcvt.s32.f32 %v250
        %v253 = vcvt.s32.f32 %v251
        %v254 = vand.u32 2147483647, %v232
        %v255 = vand.u32 2147483647, %v233
        %v256 = vsub.f32 0.0, %v254
        %v257 = vsub.f32 0.0, %v255
        %v258 = vmul.f32 %v256, 1.442695
        %v259 = vpow.pop %v258
        %v260 = vmul.f32 %v257, 1.442695
        %v261 = vpow.pop %v260
        %v262 = vadd.f32 %v259, 1.0
        %v263 = vadd.f32 %v261, 1.0
        %v264 = vlog2.pop %v262
        %v265 = vmul.f32 %v264, 0.6931472
        %v266 = vlog2.pop %v263
        %v267 = vmul.f32 %v266, 0.6931472
        %v268 = vmin.f32 %v232, 0.0
        %v269 = vmin.f32 %v233, 0.0
        %v270 = vsub.f32 %v268, %v265
        %v271 = vsub.f32 %v269, %v267
        %v272 = vmax.f32 %v270, -9.2103405
        %v273 = vmax.f32 %v271, -9.2103405
        %v274 = vmin.f32 %v272, -0.000100005
        %v275 = vmin.f32 %v273, -0.000100005
        %v276 = vmax.f32 %v232, 0.0
        %v277 = vmax.f32 %v233, 0.0
        %v278 = vsub.f32 0.0, %v276
        %v279 = vsub.f32 0.0, %v277
        %v280 = vsub.f32 %v278, %v265
        %v281 = vsub.f32 %v279, %v267
        %v282 = vmax.f32 %v280, -9.2103405
        %v283 = vmax.f32 %v281, -9.2103405
        %v284 = vmin.f32 %v282, -0.000100005
        %v285 = vmin.f32 %v283, -0.000100005
        %s286 = scalar_lea.vmem %s180, 8 [#allocation3]
        %v287 = vld [vmem:[%s286] sm:$0xff]
        %v288 = vld [vmem:[%s286 + $0x18] sm:$0xff]
        %s289 = scalar_lea.vmem %s189, 8 [#allocation5]
        %v290 = vld [vmem:[%s289] sm:$0xff]
        %v291 = vld [vmem:[%s289 + $0x18] sm:$0xff]
        %v292 = vsub.f32 %v287, %v290
        %v293 = vsub.f32 %v288, %v291
        %v294 = vmul.f32 %v292, %v292
        %v295 = vmul.f32 %v293, %v293
        %v296 = vadd.f32 %v294, 0.0
        %v297 = vadd.f32 %v295, 0.0
        %s298 = scalar_lea.vmem %s180, 16 [#allocation3]
        %v299 = vld [vmem:[%s298] sm:$0xff]
        %v300 = vld [vmem:[%s298 + $0x18] sm:$0xff]
        %s301 = scalar_lea.vmem %s189, 16 [#allocation5]
        %v302 = vld [vmem:[%s301] sm:$0xff]
        %v303 = vld [vmem:[%s301 + $0x18] sm:$0xff]
        %v304 = vsub.f32 %v299, %v302
        %v305 = vsub.f32 %v300, %v303
        %v306 = vmul.f32 %v304, %v304
        %v307 = vmul.f32 %v305, %v305
        %v308 = vadd.f32 %v296, %v306
        %v309 = vadd.f32 %v297, %v307
        %v310 = vmul.f32 %v244, %v274
        %v311 = vmul.f32 %v245, %v275
        %v312 = vadd.f32 %v244, %v248
        %v313 = vadd.f32 %v245, %v249
        %v314 = vadd.f32 %v244, %v252
        %v315 = vadd.f32 %v245, %v253
        %v316 = vld [vmem:[#allocation2] sm:$0xff]
        %v317 = vmul.f32 %v248, %v284
        %v318 = vmul.f32 %v249, %v285
        %v319 = vadd.f32 %v310, %v317
        %v320 = vadd.f32 %v311, %v318
        %vm321 = vcmask 130048
        %v322 = vsel %vm321, %v319, 0.0
        %v323 = vsel %vm321, %v320, 0.0
        %v324 = vadd.f32 %v322, %v323
        %v325 = vadd.f32 %v316, %v324
        %326 = vst.msk [vmem:[#allocation2] sm:$0xff] %vm321, %v325
        %s327 = scalar_lea.vmem [#allocation2], 8
        %v328 = vld [vmem:[%s327] sm:$0xff]
        %v329 = vmul.f32 %v252, %v284
        %v330 = vmul.f32 %v253, %v285
        %v331 = vadd.f32 %v310, %v329
        %v332 = vadd.f32 %v311, %v330
        %v333 = vsel %vm321, %v331, 0.0
        %v334 = vsel %vm321, %v332, 0.0
        %v335 = vadd.f32 %v333, %v334
        %v336 = vadd.f32 %v328, %v335
        %337 = vst.msk [vmem:[%s327] sm:$0xff] %vm321, %v336
        %s338 = scalar_lea.vmem [#allocation2], 16
        %v339 = vld [vmem:[%s338] sm:$0xff]
        %v340 = vsel %vm321, %v312, 0.0
        %v341 = vsel %vm321, %v313, 0.0
        %v342 = vadd.f32 %v340, %v341
        %v343 = vadd.f32 %v339, %v342
        %344 = vst.msk [vmem:[%s338] sm:$0xff] %vm321, %v343
        %s345 = scalar_lea.vmem [#allocation2], 24
        %v346 = vld [vmem:[%s345] sm:$0xff]
        %v347 = vsel %vm321, %v314, 0.0
        %v348 = vsel %vm321, %v315, 0.0
        %v349 = vadd.f32 %v347, %v348
        %v350 = vadd.f32 %v346, %v349
        %351 = vst.msk [vmem:[%s345] sm:$0xff] %vm321, %v350
        %s352 = scalar_lea.vmem [#allocation2], 32
        %v353 = vld [vmem:[%s352] sm:$0xff]
        %v354 = vmul.f32 %v312, %v308
        %v355 = vmul.f32 %v313, %v309
        %v356 = vsel %vm321, %v354, 0.0
        %v357 = vsel %vm321, %v355, 0.0
        %v358 = vadd.f32 %v356, %v357
        %v359 = vadd.f32 %v353, %v358
        %360 = vst.msk [vmem:[%s352] sm:$0xff] %vm321, %v359
        %s361 = scalar_lea.vmem [#allocation2], 40
        %v362 = vld [vmem:[%s361] sm:$0xff]
        %v363 = vmul.f32 %v314, %v308
        %v364 = vmul.f32 %v315, %v309
        %v365 = vsel %vm321, %v363, 0.0
        %v366 = vsel %vm321, %v364, 0.0
        %v367 = vadd.f32 %v365, %v366
        %v368 = vadd.f32 %v362, %v367
        %369 = vst.msk [vmem:[%s361] sm:$0xff] %vm321, %v368
        %s370 = scalar_lea.vmem [#allocation2], 48
        %v371 = vld [vmem:[%s370] sm:$0xff]
        %v372 = vsel %vm321, %v248, 0.0
        %v373 = vsel %vm321, %v249, 0.0
        %v374 = vadd.f32 %v372, %v373
        %v375 = vadd.f32 %v371, %v374
        %376 = vst.msk [vmem:[%s370] sm:$0xff] %vm321, %v375
        // Predicated region
        $region41: #{tpu_custom_call.1} parent=27 // pred_check
          %p377 = pneg %p220
        $region42: #{tpu_custom_call.1} parent=27 // pred_check_branch
          %379 = sbr.rel (%p377) target = $region44
        $region43: #{tpu_custom_call.1} parent=27 // pred_region
          %v380 = vld [vmem:[#allocation2] sm:$0xff]
          %v381 = vsel %vm321, %v380, 0.0
          %v382 = vrot.slane %v381, 4
          %v383 = vadd.f32 %v381, %v382
          %v384 = vrot.slane %v383, 2
          %v385 = vadd.f32 %v383, %v384
          %v386 = vrot.slane %v385, 1
          %v387 = vadd.f32 %v385, %v386
          %vm388 = vcmask 122880
          %389 = vst.msk [vmem:[%s219] sm:$0x1] %vm388, %v387
          %v390 = vld [vmem:[%s327] sm:$0xff]
          %v391 = vsel %vm321, %v390, 0.0
          %v392 = vrot.slane %v391, 4
          %v393 = vadd.f32 %v391, %v392
          %v394 = vrot.slane %v393, 2
          %v395 = vadd.f32 %v393, %v394
          %v396 = vrot.slane %v395, 1
          %v397 = vadd.f32 %v395, %v396
          %398 = vst.msk [vmem:[%s219 + $0x1] sm:$0x1] %vm388, %v397
          %v399 = vld [vmem:[%s338] sm:$0xff]
          %v400 = vsel %vm321, %v399, 0.0
          %v401 = vrot.slane %v400, 4
          %v402 = vadd.f32 %v400, %v401
          %v403 = vrot.slane %v402, 2
          %v404 = vadd.f32 %v402, %v403
          %v405 = vrot.slane %v404, 1
          %v406 = vadd.f32 %v404, %v405
          %407 = vst.msk [vmem:[%s219 + $0x2] sm:$0x1] %vm388, %v406
          %v408 = vld [vmem:[%s345] sm:$0xff]
          %v409 = vsel %vm321, %v408, 0.0
          %v410 = vrot.slane %v409, 4
          %v411 = vadd.f32 %v409, %v410
          %v412 = vrot.slane %v411, 2
          %v413 = vadd.f32 %v411, %v412
          %v414 = vrot.slane %v413, 1
          %v415 = vadd.f32 %v413, %v414
          %416 = vst.msk [vmem:[%s219 + $0x3] sm:$0x1] %vm388, %v415
          %v417 = vld [vmem:[%s352] sm:$0xff]
          %v418 = vsel %vm321, %v417, 0.0
          %v419 = vrot.slane %v418, 4
          %v420 = vadd.f32 %v418, %v419
          %v421 = vrot.slane %v420, 2
          %v422 = vadd.f32 %v420, %v421
          %v423 = vrot.slane %v422, 1
          %v424 = vadd.f32 %v422, %v423
          %425 = vst.msk [vmem:[%s219 + $0x4] sm:$0x1] %vm388, %v424
          %v426 = vld [vmem:[%s361] sm:$0xff]
          %v427 = vsel %vm321, %v426, 0.0
          %v428 = vrot.slane %v427, 4
          %v429 = vadd.f32 %v427, %v428
          %v430 = vrot.slane %v429, 2
          %v431 = vadd.f32 %v429, %v430
          %v432 = vrot.slane %v431, 1
          %v433 = vadd.f32 %v431, %v432
          %434 = vst.msk [vmem:[%s219 + $0x5] sm:$0x1] %vm388, %v433
          %v435 = vld [vmem:[%s370] sm:$0xff]
          %v436 = vsel %vm321, %v435, 0.0
          %v437 = vrot.slane %v436, 4
          %v438 = vadd.f32 %v436, %v437
          %v439 = vrot.slane %v438, 2
          %v440 = vadd.f32 %v438, %v439
          %v441 = vrot.slane %v440, 1
          %v442 = vadd.f32 %v440, %v441
          %443 = vst.msk [vmem:[%s219 + $0x6] sm:$0x1] %vm388, %v442
        $region44: #{tpu_custom_call.1} parent=27 // pred_fallthru
          _
        %p444 = scmp.lt.s32.totalorder %s23, 1
        %s445 = scalar_select %p444, %s23, 1
        %s446 = smul.addr %s445, 8
        %s447 = scalar_lea.vmem %s2, %s446
        // Predicated region
        $region45: #{tpu_custom_call.1} parent=27 // pred_check
          %p448 = pneg %p105
        $region46: #{tpu_custom_call.1} parent=27 // pred_check_branch
          %450 = sbr.rel (%p448) target = $region48
        $region47: #{tpu_custom_call.1} parent=27 // pred_region
          _
        $region48: #{tpu_custom_call.1} parent=27 // pred_fallthru
          _
      $region28: #{tpu_custom_call.1} parent=5 // pred_fallthru
        _
      %p451 = scmp.le.s32.totalorder 2, %s14
      // Predicated region
      $region49: #{tpu_custom_call.1} parent=5 // pred_check
        %p452 = pneg %p451
      $region50: #{tpu_custom_call.1} parent=5 // pred_check_branch
        %454 = sbr.rel (%p452) target = $region52
      $region51: #{tpu_custom_call.1} parent=5 // pred_region
        %s455 = ssub.s32 %s14, 2
        // Predicated region
        $region53: #{tpu_custom_call.1} parent=51 // pred_check
          %p456 = pneg %p111
        $region54: #{tpu_custom_call.1} parent=51 // pred_check_branch
          %458 = sbr.rel (%p456) target = $region56
        $region55: #{tpu_custom_call.1} parent=51 // pred_region
          %p459 = scmp.lt.s32.totalorder %s25, 1
          %s460 = scalar_select %p459, %s25, 1
          %s461 = smul.addr %s460, 8
          %s462 = scalar_lea.vmem %s2, %s461
        $region56: #{tpu_custom_call.1} parent=51 // pred_fallthru
          _
      $region52: #{tpu_custom_call.1} parent=5 // pred_fallthru
        _
    $region6: #{tpu_custom_call.1} parent=1 // loop_footer
      %s18 = sadd.s32 1, %s14
    $region7: #{tpu_custom_call.1} parent=1 // loop_footer_branch
      %13 = sbr.rel target = $region3
    $region8: #{tpu_custom_call.1} parent=1 // loop_exit
      _
    %463 = vsyncpa [#allocation4], 1
    %s464 = scalar_lea.sflag [#allocation4], 1
    %465 = vsyncpa %s464, 1
    %466 = vsyncpa [#allocation6], 1
    %s467 = scalar_lea.sflag [#allocation6], 1
    %468 = vsyncpa %s467, 1

</llo_original>
